<compile_context>
chip_gen: v7x
topology: tpu7x:2x2x1
jax: 0.10.0
libtpu: 0.0.40
codegen_flags: <defaults>
</compile_context>

<pallas_src>
import jax
import jax.numpy as jnp
from jax.experimental import pallas as pl
from jax.experimental.pallas import tpu as pltpu

LANE = 128  # pad every matmul dimension to a full lane width
# TODO(synk): on v6e/v7x with hidden/proj >= 256, pad to 256 so each vmatmul
# feeds the full 2x256x256 MXU; irrelevant at 128-padded toy sizes.


def _round_up(x, m=LANE):
    return ((x + m - 1) // m) * m


def _pad2d(a, rows, cols, dtype):
    out = jnp.zeros((rows, cols), dtype)
    return out.at[: a.shape[0], : a.shape[1]].set(a.astype(dtype))


def _pick_tile(n, candidates=(512, 256, 128)):
    """Largest tile from `candidates` dividing n (n is always a multiple of 128)."""
    for c in candidates:
        if c <= n and n % c == 0:
            return c
    return n


def _vmem_limit(est_bytes):
    # Estimated working set * 2 headroom, clamped to [32 MiB, 48 MiB] so it is
    # above the v5e/v6e defaults yet safely inside v7x's 64 MiB physical VMEM.
    return int(min(max(est_bytes * 2, 32 << 20), 48 << 20))


# ----------------------------------------------------------------------------
# Pallas kernels
# ----------------------------------------------------------------------------
def _gcn_agg_then_transform_kernel(a_ref, m_ref, w_ref, b_ref, o_ref, acc_ref):
    """acc += A_tile @ M_tile over K; at last K: relu(acc @ W + b) -> bf16."""
    k = pl.program_id(2)

    @pl.when(k == 0)
    def _():
        acc_ref[...] = jnp.zeros_like(acc_ref)

    acc_ref[...] += jnp.dot(a_ref[...], m_ref[...],
                            preferred_element_type=jnp.float32)

    @pl.when(k == pl.num_programs(2) - 1)
    def _():
        h = jnp.dot(acc_ref[...].astype(jnp.bfloat16), w_ref[...],
                    preferred_element_type=jnp.float32)
        o_ref[...] = jnp.maximum(h + b_ref[...], 0.0).astype(o_ref.dtype)


def _gcn_transform_then_agg_kernel(a_ref, m_ref, w_ref, b_ref, o_ref, acc_ref):
    """acc += A_tile @ (M_tile @ W) over K; at last K: relu(acc + b) -> bf16."""
    k = pl.program_id(2)

    @pl.when(k == 0)
    def _():
        acc_ref[...] = jnp.zeros_like(acc_ref)

    mw = jnp.dot(m_ref[...], w_ref[...], preferred_element_type=jnp.float32)
    acc_ref[...] += jnp.dot(a_ref[...], mw.astype(jnp.bfloat16),
                            preferred_element_type=jnp.float32)

    @pl.when(k == pl.num_programs(2) - 1)
    def _():
        o_ref[...] = jnp.maximum(acc_ref[...] + b_ref[...],
                                 0.0).astype(o_ref.dtype)


def gcn_layer(a_stack, m_stack, w, b):
    """One GCN layer relu(A @ M @ W + b) for all stacked views, tiled.

    a_stack: [V, NP, NP] bf16 normalized adjacency per view
    m_stack: [V, NP, C_in] bf16 node features / previous-layer activations
    w:       [C_in, C_out] bf16, b: [1, C_out] f32
    returns  [V, NP, C_out] bf16 (padded)
    """
    v, np_, _ = a_stack.shape
    c_in = m_stack.shape[2]
    c_out = w.shape[1]

    tm = _pick_tile(np_)
    tk = _pick_tile(np_)

    # Trace-time matmul-association choice (review item 6).
    transform_first = c_in > c_out
    kernel = (_gcn_transform_then_agg_kernel if transform_first
              else _gcn_agg_then_transform_kernel)
    acc_cols = c_out if transform_first else c_in

    # VMEM budget: double-buffered streamed blocks + resident W/b + accumulator.
    est = (2 * (tm * tk * 2 + tk * c_in * 2 + tm * c_out * 2)
           + 2 * (c_in * c_out * 2 + c_out * 4)
           + tm * acc_cols * 4)

    return pl.pallas_call(
        kernel,
        out_shape=jax.ShapeDtypeStruct((v, np_, c_out), jnp.bfloat16),
        grid=(v, np_ // tm, np_ // tk),
        in_specs=[
            # A tile (view dim squeezed out of the kernel Ref)
            pl.BlockSpec((None, tm, tk), lambda vi, mi, ki: (vi, mi, ki)),
            # streamed operand tile (X or H), one K-tile of rows
            pl.BlockSpec((None, tk, c_in), lambda vi, mi, ki: (vi, ki, 0)),
            # weights / bias: constant index_map -> VMEM-resident across steps
            pl.BlockSpec((c_in, c_out), lambda vi, mi, ki: (0, 0)),
            pl.BlockSpec((1, c_out), lambda vi, mi, ki: (0, 0)),
        ],
        out_specs=pl.BlockSpec((None, tm, c_out), lambda vi, mi, ki: (vi, mi, 0)),
        scratch_shapes=[pltpu.VMEM((tm, acc_cols), jnp.float32)],
        compiler_params=pltpu.CompilerParams(
            dimension_semantics=("parallel", "parallel", "arbitrary"),
            vmem_limit_bytes=_vmem_limit(est)),
    )(a_stack, m_stack, w, b)


def _project_kernel(z_ref, w1_ref, b1_ref, w2_ref, b2_ref, o_ref):
    """fc1 -> ELU -> fc2 for one row tile of z (weights stored [in, out])."""
    h = jnp.dot(z_ref[...], w1_ref[...], preferred_element_type=jnp.float32)
    h = h + b1_ref[...]
    # ELU(alpha=1); clamp the expm1 argument so a future backward pass through
    # this `where` cannot produce NaN gradients on the positive branch.
    h = jnp.where(h > 0.0, h, jnp.expm1(jnp.minimum(h, 0.0)))
    out = jnp.dot(h.astype(jnp.bfloat16), w2_ref[...],
                  preferred_element_type=jnp.float32) + b2_ref[...]
    o_ref[...] = out.astype(o_ref.dtype)


def encoder_project(pparams, z_padded):
    """project(z) = fc2(ELU(fc1(z))) on the padded bf16 z, row-tiled."""
    np_, hp = z_padded.shape
    pp = pparams["fc1_w"].shape[1]
    hp_out = pparams["fc2_w"].shape[1]
    tm = _pick_tile(np_)

    est = (2 * (tm * hp * 2 + tm * hp_out * 2)
           + 2 * (hp * pp * 2 + pp * hp_out * 2 + (pp + hp_out) * 4))

    return pl.pallas_call(
        _project_kernel,
        out_shape=jax.ShapeDtypeStruct((np_, hp_out), jnp.bfloat16),
        grid=(np_ // tm,),
        in_specs=[
            pl.BlockSpec((tm, hp), lambda i: (i, 0)),
            pl.BlockSpec((hp, pp), lambda i: (0, 0)),
            pl.BlockSpec((1, pp), lambda i: (0, 0)),
            pl.BlockSpec((pp, hp_out), lambda i: (0, 0)),
            pl.BlockSpec((1, hp_out), lambda i: (0, 0)),
        ],
        out_specs=pl.BlockSpec((tm, hp_out), lambda i: (i, 0)),
        compiler_params=pltpu.CompilerParams(
            dimension_semantics=("parallel",),
            vmem_limit_bytes=_vmem_limit(est)),
    )(z_padded, pparams["fc1_w"], pparams["fc1_b"],
      pparams["fc2_w"], pparams["fc2_b"])


# ----------------------------------------------------------------------------
# Glue: graph normalization, augmentors, parameter init / padding (plain JAX)
# ----------------------------------------------------------------------------
def normalized_adjacency(edge_index, edge_weight, num_nodes):
    """Dense GCN-normalized adjacency: D^{-1/2} (A + I) D^{-1/2}."""
    src, dst = edge_index[0], edge_index[1]
    a = jnp.zeros((num_nodes, num_nodes), jnp.float32).at[dst, src].add(edge_weight)
    a = a + jnp.eye(num_nodes, dtype=jnp.float32)  # self-loops, weight 1
    deg = a.sum(axis=1)
    dinv = jnp.where(deg > 0.0, 1.0 / jnp.sqrt(deg), 0.0)
    return dinv[:, None] * a * dinv[None, :]


def feature_masking(x, pf, key):
    keep = jax.random.bernoulli(key, 1.0 - pf, (x.shape[1],))
    return x * keep.astype(x.dtype)[None, :]


def edge_removing(edge_weight, pe, key, num_undirected=None):
    """Drop edges with prob pe.  If the edge list is stored as
    [E_u forward ; E_u reverse], both directions of an undirected edge share
    one Bernoulli draw (matches GRACE's EdgeRemoving semantics)."""
    if num_undirected is not None and edge_weight.shape[0] == 2 * num_undirected:
        keep = jax.random.bernoulli(key, 1.0 - pe, (num_undirected,))
        keep = jnp.concatenate([keep, keep])
    else:
        keep = jax.random.bernoulli(key, 1.0 - pe, edge_weight.shape)
    return edge_weight * keep.astype(edge_weight.dtype)


def init_params(key, in_dim, hidden_dim, proj_dim):
    ks = jax.random.split(key, 6)

    def glorot(k, shape):
        lim = jnp.sqrt(6.0 / (shape[0] + shape[1]))
        return jax.random.uniform(k, shape, jnp.float32, -lim, lim)

    return {
        "gcn_w1": glorot(ks[0], (in_dim, hidden_dim)),
        "gcn_b1": jnp.zeros((hidden_dim,), jnp.float32),
        "gcn_w2": glorot(ks[1], (hidden_dim, hidden_dim)),
        "gcn_b2": jnp.zeros((hidden_dim,), jnp.float32),
        "fc1_w": glorot(ks[2], (hidden_dim, proj_dim)),
        "fc1_b": jax.random.uniform(ks[3], (proj_dim,), jnp.float32, -0.1, 0.1),
        "fc2_w": glorot(ks[4], (proj_dim, hidden_dim)),
        "fc2_b": jax.random.uniform(ks[5], (hidden_dim,), jnp.float32, -0.1, 0.1),
    }


def pad_params(params, in_dim, hidden_dim, proj_dim):
    """Zero-pad weights/biases to 128-lane shapes; weights bf16, biases f32."""
    fp, hp, pp = _round_up(in_dim), _round_up(hidden_dim), _round_up(proj_dim)
    return {
        "gcn_w1": _pad2d(params["gcn_w1"], fp, hp, jnp.bfloat16),
        "gcn_b1": _pad2d(params["gcn_b1"][None, :], 1, hp, jnp.float32),
        "gcn_w2": _pad2d(params["gcn_w2"], hp, hp, jnp.bfloat16),
        "gcn_b2": _pad2d(params["gcn_b2"][None, :], 1, hp, jnp.float32),
        "fc1_w": _pad2d(params["fc1_w"], hp, pp, jnp.bfloat16),
        "fc1_b": _pad2d(params["fc1_b"][None, :], 1, pp, jnp.float32),
        "fc2_w": _pad2d(params["fc2_w"], pp, hp, jnp.bfloat16),
        "fc2_b": _pad2d(params["fc2_b"][None, :], 1, hp, jnp.float32),
    }


def _make_views(x, edge_index, edge_weight, pe1, pf1, pe2, pf2, key,
                num_undirected, fp):
    """Build the 3 views (original, aug1, aug2) as padded bf16 stacks, plus the
    raw f32 adjacencies/features (used by the pure-JAX reference)."""
    n = x.shape[0]
    np_ = _round_up(n)
    if edge_weight is None:
        edge_weight = jnp.ones((edge_index.shape[1],), jnp.float32)
    if key is None:
        key = jax.random.PRNGKey(1)
    k1, k2, k3, k4 = jax.random.split(key, 4)

    x1 = feature_masking(x, pf1, k1)
    ew1 = edge_removing(edge_weight, pe1, k2, num_undirected)
    x2 = feature_masking(x, pf2, k3)
    ew2 = edge_removing(edge_weight, pe2, k4, num_undirected)

    a0 = normalized_adjacency(edge_index, edge_weight, n)
    a1 = normalized_adjacency(edge_index, ew1, n)
    a2 = normalized_adjacency(edge_index, ew2, n)

    # TODO(synk): for large graphs share one A plus per-view edge masks (or go
    # sparse/CSR) instead of materializing three dense NPxNP adjacencies.
    a_stack = jnp.stack([_pad2d(a, np_, np_, jnp.bfloat16) for a in (a0, a1, a2)])
    x_stack = jnp.stack([_pad2d(xv, np_, fp, jnp.bfloat16) for xv in (x, x1, x2)])
    return a_stack, x_stack, (a0, a1, a2), (x, x1, x2)


def encoder_forward(pparams, x, edge_index, edge_weight=None,
                    pe1=0.3, pf1=0.3, pe2=0.4, pf2=0.2,
                    aug_key=None, num_undirected=None):
    """Mirrors Encoder.forward: returns (z, z1, z2) as PADDED bf16 [NP, HP]
    arrays (crop with z[:N, :hidden]); padded form feeds encoder_project
    directly with no re-pad/re-cast."""
    fp = pparams["gcn_w1"].shape[0]
    a_stack, x_stack, _, _ = _make_views(x, edge_index, edge_weight,
                                         pe1, pf1, pe2, pf2, aug_key,
                                         num_undirected, fp)
    h_all = gcn_layer(a_stack, x_stack, pparams["gcn_w1"], pparams["gcn_b1"])
    z_all = gcn_layer(a_stack, h_all, pparams["gcn_w2"], pparams["gcn_b2"])
    return z_all[0], z_all[1], z_all[2]


# ----------------------------------------------------------------------------
# Pure-JAX f32 reference (for correctness checking only)
# ----------------------------------------------------------------------------
def _gcn_ref(a, xv, params):
    h = jax.nn.relu(a @ xv @ params["gcn_w1"] + params["gcn_b1"])
    return jax.nn.relu(a @ h @ params["gcn_w2"] + params["gcn_b2"])


def _project_ref(z, params):
    h = jax.nn.elu(z @ params["fc1_w"] + params["fc1_b"])
    return h @ params["fc2_w"] + params["fc2_b"]


# ----------------------------------------------------------------------------
if __name__ == "__main__":
    key = jax.random.PRNGKey(0)
    k_x, k_e, k_p, k_aug = jax.random.split(key, 4)

    # F_IN > hidden (after padding: 256 > 128) exercises both layer variants.
    N, F_IN, HIDDEN, PROJ, E_EXTRA = 32, 200, 32, 16, 24

    x = jax.random.normal(k_x, (N, F_IN), jnp.float32)

    # deterministic small graph: ring + random extra edges, stored as
    # [forward ; reverse] directed copies of each undirected edge
    ring_src = jnp.arange(N, dtype=jnp.int32)
    ring_dst = (ring_src + 1) % N
    rand_src = jax.random.randint(k_e, (E_EXTRA,), 0, N, dtype=jnp.int32)
    rand_dst = jax.random.randint(jax.random.fold_in(k_e, 1), (E_EXTRA,), 0, N,
                                  dtype=jnp.int32)
    src = jnp.concatenate([ring_src, rand_src])
    dst = jnp.concatenate([ring_dst, rand_dst])
    num_undirected = int(src.shape[0])
    edge_index = jnp.stack([jnp.concatenate([src, dst]),
                            jnp.concatenate([dst, src])], axis=0)

    params = init_params(k_p, F_IN, HIDDEN, PROJ)
    pparams = pad_params(params, F_IN, HIDDEN, PROJ)

    z_pad, z1_pad, z2_pad = encoder_forward(pparams, x, edge_index, None,
                                            aug_key=k_aug,
                                            num_undirected=num_undirected)
    h_pad = encoder_project(pparams, z_pad)   # consumes padded bf16 z directly
    jax.block_until_ready((z_pad, z1_pad, z2_pad, h_pad))

    z = z_pad[:N, :HIDDEN].astype(jnp.float32)
    z1 = z1_pad[:N, :HIDDEN].astype(jnp.float32)
    z2 = z2_pad[:N, :HIDDEN].astype(jnp.float32)
    h = h_pad[:N, :HIDDEN].astype(jnp.float32)

    # pure-JAX f32 reference (identical keys -> identical augmentations)
    _, _, a_list, x_list = _make_views(x, edge_index, None, 0.3, 0.3, 0.4, 0.2,
                                       k_aug, num_undirected,
                                       pparams["gcn_w1"].shape[0])
    z_refs = [_gcn_ref(a, xv, params) for a, xv in zip(a_list, x_list)]
    h_ref = _project_ref(z, params)

    assert z.shape == (N, HIDDEN) and z1.shape == (N, HIDDEN) and z2.shape == (N, HIDDEN)
    assert h.shape == (N, HIDDEN)
    assert bool(jnp.all(jnp.isfinite(z)) & jnp.all(jnp.isfinite(h)))
    for got, ref in zip((z, z1, z2), z_refs):
        assert bool(jnp.allclose(got, ref, rtol=5e-2, atol=5e-2)), "GCN mismatch"
    assert bool(jnp.allclose(h, h_ref, rtol=5e-2, atol=5e-2)), "projection mismatch"
    print("KERNEL_OK")
</pallas_src>

<mosaic_0001>
module attributes {stable_mosaic.version = 11 : i64} {
  func.func @_gcn_transform_then_agg_kernel(%arg0: i32, %arg1: i32, %arg2: i32, %arg3: memref<1x128x128xbf16, #tpu.memory_space<vmem>>, %arg4: memref<1x128x256xbf16, #tpu.memory_space<vmem>>, %arg5: memref<256x128xbf16, #tpu.memory_space<vmem>>, %arg6: memref<1x128xf32, #tpu.memory_space<vmem>>, %arg7: memref<1x128x128xbf16, #tpu.memory_space<vmem>>, %arg8: memref<128x128xf32, #tpu.memory_space<vmem>>) attributes {dimension_semantics = [#tpu.dimension_semantics<parallel>, #tpu.dimension_semantics<parallel>, #tpu.dimension_semantics<arbitrary>], iteration_bounds = array<i64: 3, 1, 1>, scalar_prefetch = 0 : i64, scratch_operands = 1 : i64, tpu.core_type = #tpu.core_type<tc>, window_params = [{transform_indices = @transform_0, window_bounds = array<i64: 1, 128, 128>}, {transform_indices = @transform_1, window_bounds = array<i64: 1, 128, 256>}, {pipeline_mode = #tpu.pipeline_mode<synchronous>, transform_indices = @transform_2, window_bounds = array<i64: 256, 128>}, {pipeline_mode = #tpu.pipeline_mode<synchronous>, transform_indices = @transform_3, window_bounds = array<i64: 1, 128>}, {transform_indices = @transform_4, window_bounds = array<i64: 1, 128, 128>}]} {
    %c0_i32 = arith.constant 0 : i32
    %0 = arith.cmpi eq, %arg2, %c0_i32 : i32
    %1 = arith.extui %0 : i1 to i32
    %c0_i32_0 = arith.constant 0 : i32
    %2 = arith.cmpi ne, %1, %c0_i32_0 : i32
    scf.if %2 {
      %cst_15 = arith.constant 0.000000e+00 : f32
      %17 = vector.broadcast %cst_15 : f32 to vector<128x128xf32>
      %c0_16 = arith.constant 0 : index
      %c0_17 = arith.constant 0 : index
      %18 = vector.load %arg8[%c0_16, %c0_17] : memref<128x128xf32, #tpu.memory_space<vmem>>, vector<128x128xf32>
      tpu.vector_store %arg8[%c0_16, %c0_17], %17 {strides = array<i32>} : memref<128x128xf32, #tpu.memory_space<vmem>>, vector<128x128xf32>,
    } else {
    }
    %c0 = arith.constant 0 : index
    %c0_1 = arith.constant 0 : index
    %c0_2 = arith.constant 0 : index
    %3 = vector.load %arg4[%c0, %c0_1, %c0_2] : memref<1x128x256xbf16, #tpu.memory_space<vmem>>, vector<1x128x256xbf16>
    %4 = vector.shape_cast %3 : vector<1x128x256xbf16> to vector<128x256xbf16>
    %c0_3 = arith.constant 0 : index
    %c0_4 = arith.constant 0 : index
    %5 = vector.load %arg5[%c0_3, %c0_4] : memref<256x128xbf16, #tpu.memory_space<vmem>>, vector<256x128xbf16>
    %cst = arith.constant dense<0.000000e+00> : vector<128x128xf32>
    %6 = tpu.matmul %4, %5, %cst {dimension_numbers = #tpu.dot_dimension_numbers<[1], [0], [0], [1], [0, 0, 1, 1], [], []>} : vector<128x256xbf16>, vector<256x128xbf16>, vector<128x128xf32> -> vector<128x128xf32>
    %c0_5 = arith.constant 0 : index
    %c0_6 = arith.constant 0 : index
    %7 = vector.load %arg8[%c0_5, %c0_6] : memref<128x128xf32, #tpu.memory_space<vmem>>, vector<128x128xf32>
    %c0_7 = arith.constant 0 : index
    %c0_8 = arith.constant 0 : index
    %c0_9 = arith.constant 0 : index
    %8 = vector.load %arg3[%c0_7, %c0_8, %c0_9] : memref<1x128x128xbf16, #tpu.memory_space<vmem>>, vector<1x128x128xbf16>
    %9 = vector.shape_cast %8 : vector<1x128x128xbf16> to vector<128x128xbf16>
    %10 = arith.truncf %6 : vector<128x128xf32> to vector<128x128xbf16>
    %cst_10 = arith.constant dense<0.000000e+00> : vector<128x128xf32>
    %11 = tpu.matmul %9, %10, %cst_10 {dimension_numbers = #tpu.dot_dimension_numbers<[1], [0], [0], [1], [0, 0, 1, 1], [], []>} : vector<128x128xbf16>, vector<128x128xbf16>, vector<128x128xf32> -> vector<128x128xf32>
    %12 = arith.addf %7, %11 : vector<128x128xf32>
    %c0_11 = arith.constant 0 : index
    %c0_12 = arith.constant 0 : index
    %13 = vector.load %arg8[%c0_11, %c0_12] : memref<128x128xf32, #tpu.memory_space<vmem>>, vector<128x128xf32>
    tpu.vector_store %arg8[%c0_11, %c0_12], %12 {strides = array<i32>} : memref<128x128xf32, #tpu.memory_space<vmem>>, vector<128x128xf32>,
    %c0_i32_13 = arith.constant 0 : i32
    %14 = arith.cmpi eq, %arg2, %c0_i32_13 : i32
    %15 = arith.extui %14 : i1 to i32
    %c0_i32_14 = arith.constant 0 : i32
    %16 = arith.cmpi ne, %15, %c0_i32_14 : i32
    scf.if %16 {
      %c0_15 = arith.constant 0 : index
      %c0_16 = arith.constant 0 : index
      %17 = vector.load %arg8[%c0_15, %c0_16] : memref<128x128xf32, #tpu.memory_space<vmem>>, vector<128x128xf32>
      %c0_17 = arith.constant 0 : index
      %c0_18 = arith.constant 0 : index
      %18 = vector.load %arg6[%c0_17, %c0_18] : memref<1x128xf32, #tpu.memory_space<vmem>>, vector<1x128xf32>
      %19 = vector.broadcast %18 : vector<1x128xf32> to vector<128x128xf32>
      %20 = arith.addf %17, %19 : vector<128x128xf32>
      %cst_19 = arith.constant 0.000000e+00 : f32
      %21 = vector.broadcast %cst_19 : f32 to vector<128x128xf32>
      %22 = arith.maximumf %20, %21 : vector<128x128xf32>
      %23 = arith.truncf %22 : vector<128x128xf32> to vector<128x128xbf16>
      %c0_20 = arith.constant 0 : index
      %c0_21 = arith.constant 0 : index
      %c0_22 = arith.constant 0 : index
      %24 = vector.load %arg7[%c0_20, %c0_21, %c0_22] : memref<1x128x128xbf16, #tpu.memory_space<vmem>>, vector<1x128x128xbf16>
      %25 = vector.shape_cast %24 : vector<1x128x128xbf16> to vector<128x128xbf16>
      %26 = vector.shape_cast %23 : vector<128x128xbf16> to vector<1x128x128xbf16>
      tpu.vector_store %arg7[%c0_20, %c0_21, %c0_22], %26 {strides = array<i32>} : memref<1x128x128xbf16, #tpu.memory_space<vmem>>, vector<1x128x128xbf16>,
    } else {
    }
    return
  }
  func.func @transform_0(%arg0: i32, %arg1: i32, %arg2: i32) -> (i32, i32, i32) {
    %c0_i32 = arith.constant 0 : i32
    return %arg0, %arg1, %arg2 : i32, i32, i32
  }
  func.func @transform_1(%arg0: i32, %arg1: i32, %arg2: i32) -> (i32, i32, i32) {
    %c0_i32 = arith.constant 0 : i32
    %c0_i32_0 = arith.constant 0 : i32
    return %arg0, %arg2, %c0_i32 : i32, i32, i32
  }
  func.func @transform_2(%arg0: i32, %arg1: i32, %arg2: i32) -> (i32, i32) {
    %c0_i32 = arith.constant 0 : i32
    %c0_i32_0 = arith.constant 0 : i32
    %c0_i32_1 = arith.constant 0 : i32
    return %c0_i32, %c0_i32_0 : i32, i32
  }
  func.func @transform_3(%arg0: i32, %arg1: i32, %arg2: i32) -> (i32, i32) {
    %c0_i32 = arith.constant 0 : i32
    %c0_i32_0 = arith.constant 0 : i32
    %c0_i32_1 = arith.constant 0 : i32
    return %c0_i32, %c0_i32_0 : i32, i32
  }
  func.func @transform_4(%arg0: i32, %arg1: i32, %arg2: i32) -> (i32, i32, i32) {
    %c0_i32 = arith.constant 0 : i32
    %c0_i32_0 = arith.constant 0 : i32
    return %arg0, %arg1, %c0_i32 : i32, i32, i32
  }
}

</mosaic_0001>

<llo_original>
// kernel: tpu_custom_call.1
$region0: #{tpu_custom_call.1}
  #allocation0 [shape = 'u32[]', space=smem, size = 0x4, offset = 0x4, fixed_abs, tag = 'smem constant byte address 0x4 - core index']
  #allocation1 [shape = 'u32[144,128]{1,0:T(1,128)}', space=vmem, size = 0x12000, scoped, tag = 'internal scratch']
  #allocation2 [shape = 'f32[128,128]{1,0:T(8,128)}', space=vmem, size = 0x10000, scoped, tag = 'scratch operand']
  %s0 = inlined_call_operand.hbm [shape: bf16[3,128,128], index: 0, kind: input, shape index: {}]
  %s1 = inlined_call_operand.hbm [shape: bf16[3,128,256], index: 1, kind: input, shape index: {}]
  %s2 = inlined_call_operand.hbm [shape: bf16[256,128], index: 2, kind: input, shape index: {}]
  %s3 = inlined_call_operand.vmem [shape: f32[1,128], index: 3, kind: input, shape index: {}]
  %s4 = inlined_call_operand.hbm [shape: bf16[3,128,128], index: 4, kind: output, shape index: {}]
  %s5 = sld [smem:[#allocation0]]
  $region69: #{tpu_custom_call.1} parent=0
    _
  %s7 = ssub.s32 1, %s5
  %s8 = scalar_select 0, %s7, %s5
  $region1: #{tpu_custom_call.1} parent=0
    #allocation3 [shape = 'u8[65536]{0}', space=vmem, size = 0x10000, scoped, tag = 'input window, operand 0']
    #allocation4 [shape = 's32[2]{0}', space=sflag, size = 0x8, scoped, tag = 'scoped memory for tpu_custom_call.1']
    #allocation5 [shape = 's32[2]{0}', space=sflag, size = 0x8, scoped, tag = 'scoped memory for tpu_custom_call.1']
    #allocation6 [shape = 'u8[131072]{0}', space=vmem, size = 0x20000, scoped, tag = 'input window, operand 1']
    #allocation7 [shape = 's32[2]{0}', space=sflag, size = 0x8, scoped, tag = 'scoped memory for tpu_custom_call.1']
    #allocation8 [shape = 'u8[65536]{0}', space=vmem, size = 0x10000, scoped, tag = 'input window, operand 2, single buffered']
    #allocation9 [shape = 'u8[65536]{0}', space=vmem, size = 0x10000, scoped, tag = 'output window, operand 0']
    %9 = vsyncpa [#allocation4], 0
    %s10 = scalar_lea.sflag [#allocation4], 1
    %11 = vsyncpa %s10, 0
    %12 = vsyncpa [#allocation7], 0
    %s13 = scalar_lea.sflag [#allocation7], 1
    %14 = vsyncpa %s13, 0
    %15 = vsyncpa [#allocation5], 0
    %s16 = scalar_lea.sflag [#allocation5], 1
    %17 = vsyncpa %s16, 0
    loop: start=0, step=1, limit=5
    $region2: #{tpu_custom_call.1} parent=1 // loop_pre_header
      _
    $region3: #{tpu_custom_call.1} parent=1 // loop_header
      %s19 = sphi 0, %s23
      %p20 = scmp.ge.s32.totalorder %s19, 5
      %s26 = sphi 0, %s45
      %s27 = sphi 0, %s41
      %s28 = sphi 0, %s37
      %s29 = sphi 0, %s26
      %s30 = sphi 0, %s27
      %s31 = sphi 0, %s28
      %s32 = sphi 0, %s29
      %s33 = sphi 0, %s30
      %s34 = sphi 0, %s31
      %s52 = sphi 0, %s54
      %s55 = sphi 0, %s52
      %s56 = sphi 0, %s55
      %s72 = sphi 0, %s56
      %s80 = sphi 0, %s82
      %s83 = sphi 0, %s80
      %s84 = sphi 0, %s83
      %s100 = sphi 0, %s84
      %s104 = sphi 0, %s104
      %s106 = sphi 0, %s104
      %s107 = sphi 0, %s106
      %s121 = sphi 0, %s107
      %s125 = sphi 0, %s125
      %s127 = sphi 0, %s125
      %s128 = sphi 0, %s127
      %s142 = sphi 0, %s128
      %s150 = sphi 0, %s152
      %s153 = sphi 0, %s150
      %s154 = sphi 0, %s153
      %s170 = sphi 0, %s154
    $region4: #{tpu_custom_call.1} parent=1 // loop_header_branch
      %22 = sbr.rel (%p20) target = $region8
    $region5: #{tpu_custom_call.1} parent=1 // loop_body
      %s24 = ssub.s32 %s19, 1
      %s25 = ssub.s32 %s19, 2
      %s35 = sadd.s32 1, %s28
      %p36 = scmp.ge.s32.totalorder %s35, 1
      %s37 = scalar_select %p36, 0, %s35
      %s38 = sadd.s32 1, %s27
      %s39 = scalar_select %p36, %s38, %s27
      %p40 = scmp.ge.s32.totalorder %s39, 1
      %s41 = scalar_select %p40, 0, %s39
      %s42 = sadd.s32 1, %s26
      %s43 = scalar_select %p40, %s42, %s26
      %p44 = scmp.ge.s32.totalorder %s43, 3
      %s45 = scalar_select %p44, 0, %s43
      %s46 = ssub.s32 %s26, %s45
      %s47 = ssub.s32 %s27, %s41
      %s48 = sor.u32 %s46, %s47
      %s49 = ssub.s32 %s28, %s37
      %s50 = sor.u32 %s48, %s49
      %p51 = scmp.eq.s32.totalorder %s50, 0
      %s53 = sadd.s32 %s52, 1
      %s54 = scalar_select %p51, %s52, %s53
      %p57 = pneg %p51
      %p58 = scmp.eq.s32.totalorder %s19, 2
      %p59 = por %p57, %p58
      %p60 = scmp.ne.s32.totalorder %s52, %s55
      %p61 = scmp.eq.s32.totalorder %s19, 0
      %p62 = por %p60, %p61
      %p63 = scmp.ne.s32.totalorder %s52, %s55
      %p64 = scmp.eq.s32.totalorder %s24, 2
      %p65 = por %p63, %p64
      %p66 = scmp.ne.s32.totalorder %s55, %s56
      %p67 = scmp.eq.s32.totalorder %s24, 0
      %p68 = por %p66, %p67
      %p69 = scmp.ne.s32.totalorder %s55, %s56
      %p70 = scmp.eq.s32.totalorder %s25, 2
      %p71 = por %p69, %p70
      %p73 = scmp.ne.s32.totalorder %s56, %s72
      %p74 = scmp.eq.s32.totalorder %s25, 0
      %p75 = por %p73, %p74
      %s76 = ssub.s32 %s26, %s45
      %s77 = ssub.s32 %s28, %s37
      %s78 = sor.u32 %s76, %s77
      %p79 = scmp.eq.s32.totalorder %s78, 0
      %s81 = sadd.s32 %s80, 1
      %s82 = scalar_select %p79, %s80, %s81
      %p85 = pneg %p79
      %p86 = scmp.eq.s32.totalorder %s19, 2
      %p87 = por %p85, %p86
      %p88 = scmp.ne.s32.totalorder %s80, %s83
      %p89 = scmp.eq.s32.totalorder %s19, 0
      %p90 = por %p88, %p89
      %p91 = scmp.ne.s32.totalorder %s80, %s83
      %p92 = scmp.eq.s32.totalorder %s24, 2
      %p93 = por %p91, %p92
      %p94 = scmp.ne.s32.totalorder %s83, %s84
      %p95 = scmp.eq.s32.totalorder %s24, 0
      %p96 = por %p94, %p95
      %p97 = scmp.ne.s32.totalorder %s83, %s84
      %p98 = scmp.eq.s32.totalorder %s25, 2
      %p99 = por %p97, %p98
      %p101 = scmp.ne.s32.totalorder %s84, %s100
      %p102 = scmp.eq.s32.totalorder %s25, 0
      %p103 = por %p101, %p102
      %s105 = sadd.s32 %s104, 1
      %p108 = scmp.eq.s32.totalorder %s19, 2
      %p109 = scmp.ne.s32.totalorder %s104, %s106
      %p110 = scmp.eq.s32.totalorder %s19, 0
      %p111 = por %p109, %p110
      %p112 = scmp.ne.s32.totalorder %s104, %s106
      %p113 = scmp.eq.s32.totalorder %s24, 2
      %p114 = por %p112, %p113
      %p115 = scmp.ne.s32.totalorder %s106, %s107
      %p116 = scmp.eq.s32.totalorder %s24, 0
      %p117 = por %p115, %p116
      %p118 = scmp.ne.s32.totalorder %s106, %s107
      %p119 = scmp.eq.s32.totalorder %s25, 2
      %p120 = por %p118, %p119
      %p122 = scmp.ne.s32.totalorder %s107, %s121
      %p123 = scmp.eq.s32.totalorder %s25, 0
      %p124 = por %p122, %p123
      %s126 = sadd.s32 %s125, 1
      %p129 = scmp.eq.s32.totalorder %s19, 2
      %p130 = scmp.ne.s32.totalorder %s125, %s127
      %p131 = scmp.eq.s32.totalorder %s19, 0
      %p132 = por %p130, %p131
      %p133 = scmp.ne.s32.totalorder %s125, %s127
      %p134 = scmp.eq.s32.totalorder %s24, 2
      %p135 = por %p133, %p134
      %p136 = scmp.ne.s32.totalorder %s127, %s128
      %p137 = scmp.eq.s32.totalorder %s24, 0
      %p138 = por %p136, %p137
      %p139 = scmp.ne.s32.totalorder %s127, %s128
      %p140 = scmp.eq.s32.totalorder %s25, 2
      %p141 = por %p139, %p140
      %p143 = scmp.ne.s32.totalorder %s128, %s142
      %p144 = scmp.eq.s32.totalorder %s25, 0
      %p145 = por %p143, %p144
      %s146 = ssub.s32 %s26, %s45
      %s147 = ssub.s32 %s27, %s41
      %s148 = sor.u32 %s146, %s147
      %p149 = scmp.eq.s32.totalorder %s148, 0
      %s151 = sadd.s32 %s150, 1
      %s152 = scalar_select %p149, %s150, %s151
      %p155 = pneg %p149
      %p156 = scmp.eq.s32.totalorder %s19, 2
      %p157 = por %p155, %p156
      %p158 = scmp.ne.s32.totalorder %s150, %s153
      %p159 = scmp.eq.s32.totalorder %s19, 0
      %p160 = por %p158, %p159
      %p161 = scmp.ne.s32.totalorder %s150, %s153
      %p162 = scmp.eq.s32.totalorder %s24, 2
      %p163 = por %p161, %p162
      %p164 = scmp.ne.s32.totalorder %s153, %s154
      %p165 = scmp.eq.s32.totalorder %s24, 0
      %p166 = por %p164, %p165
      %p167 = scmp.ne.s32.totalorder %s153, %s154
      %p168 = scmp.eq.s32.totalorder %s25, 2
      %p169 = por %p167, %p168
      %p171 = scmp.ne.s32.totalorder %s154, %s170
      %p172 = scmp.eq.s32.totalorder %s25, 0
      %p173 = por %p171, %p172
      %p174 = scmp.le.s32.totalorder 1, %s19
      %p175 = scmp.lt.s32.totalorder %s19, 4
      %p176 = pnand %p174, %p175
      %p177 = pneg %p176
      // Predicated region
      $region9: #{tpu_custom_call.1} parent=5 // pred_check
        _
      $region10: #{tpu_custom_call.1} parent=5 // pred_check_branch
        %179 = sbr.rel (%p176) target = $region12
      $region11: #{tpu_custom_call.1} parent=5 // pred_region
        %s180 = ssub.s32 %s19, 1
        // Predicated region
        $region13: #{tpu_custom_call.1} parent=11 // pred_check
          %p181 = pneg %p117
        $region14: #{tpu_custom_call.1} parent=11 // pred_check_branch
          %183 = sbr.rel (%p181) target = $region16
        $region15: #{tpu_custom_call.1} parent=11 // pred_region
          %s185 = ssub.s32 2048, 2048
          %186 = vsyncadd [#allocation7], %s185
          %s187 = sshll.u32 [#allocation8], 4
          %s188 = int_to_ptr.vmem [resolvable:$true] %s187
          %193 = dma.hbm_to_vmem [thread:$0]  %s2, 2048, %s188, [#allocation7], 64, 64, 4
        $region16: #{tpu_custom_call.1} parent=11 // pred_fallthru
          _
        // Predicated region
        $region17: #{tpu_custom_call.1} parent=11 // pred_check
          %p194 = pneg %p138
        $region18: #{tpu_custom_call.1} parent=11 // pred_check_branch
          %196 = sbr.rel (%p194) target = $region20
        $region19: #{tpu_custom_call.1} parent=11 // pred_region
          _
        $region20: #{tpu_custom_call.1} parent=11 // pred_fallthru
          _
      $region12: #{tpu_custom_call.1} parent=5 // pred_fallthru
        _
      %p197 = scmp.lt.s32.totalorder %s19, 3
      // Predicated region
      $region21: #{tpu_custom_call.1} parent=5 // pred_check
        %p198 = pneg %p197
      $region22: #{tpu_custom_call.1} parent=5 // pred_check_branch
        %200 = sbr.rel (%p198) target = $region24
      $region23: #{tpu_custom_call.1} parent=5 // pred_region
        // Predicated region
        $region25: #{tpu_custom_call.1} parent=23 // pred_check
          %p201 = pneg %p62
        $region26: #{tpu_custom_call.1} parent=23 // pred_check_branch
          %203 = sbr.rel (%p201) target = $region28
        $region27: #{tpu_custom_call.1} parent=23 // pred_region
          %s204 = sand.u32 %s52, 1
          %s205 = scalar_lea.sflag [#allocation4], %s204
          %s206 = sand.u32 %s52, 1
          %s207 = smul.addr %s206, 64
          %s208 = scalar_lea.vmem [#allocation3], %s207
          %s209 = smul.u32 16, %s27
          %s211 = ssub.s32 1024, 1024
          %212 = vsyncadd %s205, %s211
          %s213 = sadd.s32 %s28, %s209
          %s214 = smul.addr %s26, 16
          %s215 = sadd.s32 %s213, %s214
          %s216 = smul.addr %s215, 64
          %s217 = scalar_lea.hbm %s0, %s216
          %s218 = sshll.u32 %s208, 4
          %s219 = int_to_ptr.vmem [resolvable:$true] %s218
          %224 = dma.hbm_to_vmem [thread:$0]  %s217, 1024, %s219, %s205, 64, 64, 4
        $region28: #{tpu_custom_call.1} parent=23 // pred_fallthru
          _
        // Predicated region
        $region29: #{tpu_custom_call.1} parent=23 // pred_check
          %p225 = pneg %p90
        $region30: #{tpu_custom_call.1} parent=23 // pred_check_branch
          %227 = sbr.rel (%p225) target = $region32
        $region31: #{tpu_custom_call.1} parent=23 // pred_region
          %s228 = sand.u32 %s19, 1
          %s229 = scalar_lea.sflag [#allocation7], %s228
          %s230 = sand.u32 %s80, 1
          %s231 = smul.addr %s230, 128
          %s232 = scalar_lea.vmem [#allocation6], %s231
          %s233 = smul.u32 16, %s28
          %s235 = ssub.s32 2048, 2048
          %236 = vsyncadd %s229, %s235
          %s237 = smul.addr %s233, 2
          %s238 = smul.addr %s26, 32
          %s239 = sadd.s32 %s237, %s238
          %s240 = smul.addr %s239, 64
          %s241 = scalar_lea.hbm %s1, %s240
          %s242 = sshll.u32 %s232, 4
          %s243 = int_to_ptr.vmem [resolvable:$true] %s242
          %248 = dma.hbm_to_vmem [thread:$0]  %s241, 2048, %s243, %s229, 128, 128, 8
        $region32: #{tpu_custom_call.1} parent=23 // pred_fallthru
          _
      $region24: #{tpu_custom_call.1} parent=5 // pred_fallthru
        _
      %p249 = scmp.le.s32.totalorder 1, %s19
      %p250 = scmp.lt.s32.totalorder %s19, 4
      %p251 = pnand %p249, %p250
      %p252 = pneg %p251
      // Predicated region
      $region33: #{tpu_custom_call.1} parent=5 // pred_check
        _
      $region34: #{tpu_custom_call.1} parent=5 // pred_check_branch
        %254 = sbr.rel (%p251) target = $region36
      $region35: #{tpu_custom_call.1} parent=5 // pred_region
        %s255 = ssub.s32 %s19, 1
        %s256 = sand.u32 %s55, 1
        %s257 = scalar_lea.sflag [#allocation4], %s256
        %s258 = sand.u32 %s55, 1
        %s259 = smul.addr %s258, 64
        %s260 = scalar_lea.vmem [#allocation3], %s259
        // Predicated region
        $region37: #{tpu_custom_call.1} parent=35 // pred_check
          %p261 = pneg %p68
        $region38: #{tpu_custom_call.1} parent=35 // pred_check_branch
          %263 = sbr.rel (%p261) target = $region40
        $region39: #{tpu_custom_call.1} parent=35 // pred_region
          %264 = dma.done %s257, 1024
        $region40: #{tpu_custom_call.1} parent=35 // pred_fallthru
          _
        %s265 = sand.u32 %s24, 1
        %s266 = scalar_lea.sflag [#allocation7], %s265
        %s267 = sand.u32 %s83, 1
        %s268 = smul.addr %s267, 128
        %s269 = scalar_lea.vmem [#allocation6], %s268
        // Predicated region
        $region41: #{tpu_custom_call.1} parent=35 // pred_check
          %p270 = pneg %p96
        $region42: #{tpu_custom_call.1} parent=35 // pred_check_branch
          %272 = sbr.rel (%p270) target = $region44
        $region43: #{tpu_custom_call.1} parent=35 // pred_region
          %273 = dma.done %s266, 2048
        $region44: #{tpu_custom_call.1} parent=35 // pred_fallthru
          _
        // Predicated region
        $region45: #{tpu_custom_call.1} parent=35 // pred_check
          %p274 = pneg %p117
        $region46: #{tpu_custom_call.1} parent=35 // pred_check_branch
          %276 = sbr.rel (%p274) target = $region48
        $region47: #{tpu_custom_call.1} parent=35 // pred_region
          %277 = dma.done [#allocation7], 2048
        $region48: #{tpu_custom_call.1} parent=35 // pred_fallthru
          _
        %s278 = sand.u32 %s55, 1
        %s279 = scalar_lea.sflag [#allocation4], %s278
        %s280 = sand.u32 %s55, 1
        %s281 = smul.addr %s280, 64
        %s282 = scalar_lea.vmem [#allocation3], %s281
        %p283 = pneg %p68
        %p284 = pneg %p65
        %s285 = sand.u32 %s24, 1
        %s286 = scalar_lea.sflag [#allocation7], %s285
        %s287 = sand.u32 %s83, 1
        %s288 = smul.addr %s287, 128
        %s289 = scalar_lea.vmem [#allocation6], %s288
        %p290 = pneg %p96
        %p291 = pneg %p93
        %p292 = pneg %p117
        %p293 = pneg %p114
        %p294 = pneg %p138
        %p295 = pneg %p135
        %p296 = pneg %p166
        %p297 = pneg %p163
        %s298 = sand.u32 %s153, 1
        %s299 = scalar_lea.sflag [#allocation5], %s298
        %s300 = sand.u32 %s153, 1
        %s301 = smul.addr %s300, 64
        %s302 = scalar_lea.vmem [#allocation9], %s301
        %s303 = smul.u32 16, %s30
        %s304 = smul.u32 16, %s31
        %s305 = smul.u32 16, %s30
        %p307 = scmp.eq.s32.totalorder %s31, 0
        // Predicated region
        $region49: #{tpu_custom_call.1} parent=35 // pred_check
          %p308 = pneg %p307
        $region50: #{tpu_custom_call.1} parent=35 // pred_check_branch
          %310 = sbr.rel (%p308) target = $region52
        $region51: #{tpu_custom_call.1} parent=35 // pred_region
          %311 = vst [vmem:[#allocation2] sm:$0xff] 0.0
          %312 = vst [vmem:[#allocation2 + $0x8] sm:$0xff] 0.0
          %313 = vst [vmem:[#allocation2 + $0x10] sm:$0xff] 0.0
          %314 = vst [vmem:[#allocation2 + $0x18] sm:$0xff] 0.0
          %315 = vst [vmem:[#allocation2 + $0x20] sm:$0xff] 0.0
          %316 = vst [vmem:[#allocation2 + $0x28] sm:$0xff] 0.0
          %317 = vst [vmem:[#allocation2 + $0x30] sm:$0xff] 0.0
          %318 = vst [vmem:[#allocation2 + $0x38] sm:$0xff] 0.0
          %319 = vst [vmem:[#allocation2 + $0x40] sm:$0xff] 0.0
          %320 = vst [vmem:[#allocation2 + $0x48] sm:$0xff] 0.0
          %321 = vst [vmem:[#allocation2 + $0x50] sm:$0xff] 0.0
          %322 = vst [vmem:[#allocation2 + $0x58] sm:$0xff] 0.0
          %323 = vst [vmem:[#allocation2 + $0x60] sm:$0xff] 0.0
          %324 = vst [vmem:[#allocation2 + $0x68] sm:$0xff] 0.0
          %325 = vst [vmem:[#allocation2 + $0x70] sm:$0xff] 0.0
          %326 = vst [vmem:[#allocation2 + $0x78] sm:$0xff] 0.0
        $region52: #{tpu_custom_call.1} parent=35 // pred_fallthru
          _
        %v327 = vld [vmem:[%s269] sm:$0xff]
        %v328 = vld [vmem:[%s269 + $0x8] sm:$0xff]
        %v329 = vld [vmem:[%s269 + $0x10] sm:$0xff]
        %v330 = vld [vmem:[%s269 + $0x18] sm:$0xff]
        %v331 = vld [vmem:[%s269 + $0x20] sm:$0xff]
        %v332 = vld [vmem:[%s269 + $0x28] sm:$0xff]
        %v333 = vld [vmem:[%s269 + $0x30] sm:$0xff]
        %v334 = vld [vmem:[%s269 + $0x38] sm:$0xff]
        %v335 = vld [vmem:[%s269 + $0x40] sm:$0xff]
        %v336 = vld [vmem:[%s269 + $0x48] sm:$0xff]
        %v337 = vld [vmem:[%s269 + $0x50] sm:$0xff]
        %v338 = vld [vmem:[%s269 + $0x58] sm:$0xff]
        %v339 = vld [vmem:[%s269 + $0x60] sm:$0xff]
        %v340 = vld [vmem:[%s269 + $0x68] sm:$0xff]
        %v341 = vld [vmem:[%s269 + $0x70] sm:$0xff]
        %v342 = vld [vmem:[%s269 + $0x78] sm:$0xff]
        %v343 = vld [vmem:[#allocation8] sm:$0xf]
        %v344 = vld [vmem:[#allocation8 + $0x4] sm:$0xf]
        %v345 = vld [vmem:[#allocation8 + $0x8] sm:$0xf]
        %v346 = vld [vmem:[#allocation8 + $0xc] sm:$0xf]
        %v347 = vld [vmem:[#allocation8 + $0x10] sm:$0xf]
        %v348 = vld [vmem:[#allocation8 + $0x14] sm:$0xf]
        %v349 = vld [vmem:[#allocation8 + $0x18] sm:$0xf]
        %v350 = vld [vmem:[#allocation8 + $0x1c] sm:$0xf]
        %v351 = vld [vmem:[#allocation8 + $0x20] sm:$0xf]
        %v352 = vld [vmem:[#allocation8 + $0x24] sm:$0xf]
        %v353 = vld [vmem:[#allocation8 + $0x28] sm:$0xf]
        %v354 = vld [vmem:[#allocation8 + $0x2c] sm:$0xf]
        %v355 = vld [vmem:[#allocation8 + $0x30] sm:$0xf]
        %v356 = vld [vmem:[#allocation8 + $0x34] sm:$0xf]
        %v357 = vld [vmem:[#allocation8 + $0x38] sm:$0xf]
        %v358 = vld [vmem:[#allocation8 + $0x3c] sm:$0xf]
        %v359 = vld [vmem:[#allocation8 + $0x40] sm:$0xf]
        %v360 = vld [vmem:[#allocation8 + $0x44] sm:$0xf]
        %v361 = vld [vmem:[#allocation8 + $0x48] sm:$0xf]
        %v362 = vld [vmem:[#allocation8 + $0x4c] sm:$0xf]
        %v363 = vld [vmem:[#allocation8 + $0x50] sm:$0xf]
        %v364 = vld [vmem:[#allocation8 + $0x54] sm:$0xf]
        %v365 = vld [vmem:[#allocation8 + $0x58] sm:$0xf]
        %v366 = vld [vmem:[#allocation8 + $0x5c] sm:$0xf]
        %v367 = vld [vmem:[#allocation8 + $0x60] sm:$0xf]
        %v368 = vld [vmem:[#allocation8 + $0x64] sm:$0xf]
        %v369 = vld [vmem:[#allocation8 + $0x68] sm:$0xf]
        %v370 = vld [vmem:[#allocation8 + $0x6c] sm:$0xf]
        %v371 = vld [vmem:[#allocation8 + $0x70] sm:$0xf]
        %v372 = vld [vmem:[#allocation8 + $0x74] sm:$0xf]
        %v373 = vld [vmem:[#allocation8 + $0x78] sm:$0xf]
        %v374 = vld [vmem:[#allocation8 + $0x7c] sm:$0xf]
        %v391 = vunpack.c.l.b16 %v327
        %v392 = vunpack.c.h.b16 %v327
        %v393 = vunpack.c.l.b16 %v328
        %v394 = vunpack.c.h.b16 %v328
        %v395 = vunpack.c.l.b16 %v329
        %v396 = vunpack.c.h.b16 %v329
        %v397 = vunpack.c.l.b16 %v330
        %v398 = vunpack.c.h.b16 %v330
        %v399 = vunpack.c.l.b16 %v331
        %v400 = vunpack.c.h.b16 %v331
        %v401 = vunpack.c.l.b16 %v332
        %v402 = vunpack.c.h.b16 %v332
        %v403 = vunpack.c.l.b16 %v333
        %v404 = vunpack.c.h.b16 %v333
        %v405 = vunpack.c.l.b16 %v334
        %v406 = vunpack.c.h.b16 %v334
        %v407 = vunpack.c.l.b16 %v335
        %v408 = vunpack.c.h.b16 %v335
        %v409 = vunpack.c.l.b16 %v336
        %v410 = vunpack.c.h.b16 %v336
        %v411 = vunpack.c.l.b16 %v337
        %v412 = vunpack.c.h.b16 %v337
        %v413 = vunpack.c.l.b16 %v338
        %v414 = vunpack.c.h.b16 %v338
        %v415 = vunpack.c.l.b16 %v339
        %v416 = vunpack.c.h.b16 %v339
        %v417 = vunpack.c.l.b16 %v340
        %v418 = vunpack.c.h.b16 %v340
        %v419 = vunpack.c.l.b16 %v341
        %v420 = vunpack.c.h.b16 %v341
        %v421 = vunpack.c.l.b16 %v342
        %v422 = vunpack.c.h.b16 %v342
        %v423 = vpack.c.b16 %v393, %v391
        %v424 = vpack.c.b16 %v394, %v392
        %v425 = vpack.c.b16 %v397, %v395
        %v426 = vpack.c.b16 %v398, %v396
        %v427 = vpack.c.b16 %v401, %v399
        %v428 = vpack.c.b16 %v402, %v400
        %v429 = vpack.c.b16 %v405, %v403
        %v430 = vpack.c.b16 %v406, %v404
        %v431 = vpack.c.b16 %v409, %v407
        %v432 = vpack.c.b16 %v410, %v408
        %v433 = vpack.c.b16 %v413, %v411
        %v434 = vpack.c.b16 %v414, %v412
        %v435 = vpack.c.b16 %v417, %v415
        %v436 = vpack.c.b16 %v418, %v416
        %v437 = vpack.c.b16 %v421, %v419
        %v438 = vpack.c.b16 %v422, %v420
        %v487 = vunpack.c.l.b16 %v343
        %v488 = vunpack.c.l.b16 %v344
        %v489 = vunpack.c.l.b16 %v345
        %v490 = vunpack.c.l.b16 %v346
        %v491 = vunpack.c.l.b16 %v347
        %v492 = vunpack.c.l.b16 %v348
        %v493 = vunpack.c.l.b16 %v349
        %v494 = vunpack.c.l.b16 %v350
        %v495 = vunpack.c.l.b16 %v351
        %v496 = vunpack.c.l.b16 %v352
        %v497 = vunpack.c.l.b16 %v353
        %v498 = vunpack.c.l.b16 %v354
        %v499 = vunpack.c.l.b16 %v355
        %v500 = vunpack.c.l.b16 %v356
        %v501 = vunpack.c.l.b16 %v357
        %v502 = vunpack.c.l.b16 %v358
        %v503 = vunpack.c.l.b16 %v359
        %v504 = vunpack.c.l.b16 %v360
        %v505 = vunpack.c.l.b16 %v361
        %v506 = vunpack.c.l.b16 %v362
        %v507 = vunpack.c.l.b16 %v363
        %v508 = vunpack.c.l.b16 %v364
        %v509 = vunpack.c.l.b16 %v365
        %v510 = vunpack.c.l.b16 %v366
        %v511 = vunpack.c.l.b16 %v367
        %v512 = vunpack.c.l.b16 %v368
        %v513 = vunpack.c.l.b16 %v369
        %v514 = vunpack.c.l.b16 %v370
        %v515 = vunpack.c.l.b16 %v371
        %v516 = vunpack.c.l.b16 %v372
        %v517 = vunpack.c.l.b16 %v373
        %v518 = vunpack.c.l.b16 %v374
        %v519 = vpack.c.b16 %v488, %v487
        %v520 = vpack.c.b16 %v490, %v489
        %v521 = vpack.c.b16 %v492, %v491
        %v522 = vpack.c.b16 %v494, %v493
        %v523 = vpack.c.b16 %v496, %v495
        %v524 = vpack.c.b16 %v498, %v497
        %v525 = vpack.c.b16 %v500, %v499
        %v526 = vpack.c.b16 %v502, %v501
        %v527 = vpack.c.b16 %v504, %v503
        %v528 = vpack.c.b16 %v506, %v505
        %v529 = vpack.c.b16 %v508, %v507
        %v530 = vpack.c.b16 %v510, %v509
        %v531 = vpack.c.b16 %v512, %v511
        %v532 = vpack.c.b16 %v514, %v513
        %v533 = vpack.c.b16 %v516, %v515
        %v534 = vpack.c.b16 %v518, %v517
        %551 = vmatprep.subr.bf16.mxu0 0
        %552 = vmatpush1.bf16.msra.mxu0 %v519
        %553 = vmatprep.subr.bf16.mxu0 0
        %554 = vmatpush1.bf16.msra.mxu0 %v520
        %555 = vmatprep.subr.bf16.mxu0 0
        %556 = vmatpush1.bf16.msra.mxu0 %v521
        %557 = vmatprep.subr.bf16.mxu0 0
        %558 = vmatpush1.bf16.msra.mxu0 %v522
        %559 = vmatprep.subr.bf16.mxu0 0
        %560 = vmatpush1.bf16.msra.mxu0 %v523
        %561 = vmatprep.subr.bf16.mxu0 0
        %562 = vmatpush1.bf16.msra.mxu0 %v524
        %563 = vmatprep.subr.bf16.mxu0 0
        %564 = vmatpush1.bf16.msra.mxu0 %v525
        %565 = vmatprep.subr.bf16.mxu0 0
        %566 = vmatpush1.bf16.msra.mxu0 %v526
        %567 = vmatprep.subr.bf16.mxu0 0
        %568 = vmatpush1.bf16.msra.mxu0 %v527
        %569 = vmatprep.subr.bf16.mxu0 0
        %570 = vmatpush1.bf16.msra.mxu0 %v528
        %571 = vmatprep.subr.bf16.mxu0 0
        %572 = vmatpush1.bf16.msra.mxu0 %v529
        %573 = vmatprep.subr.bf16.mxu0 0
        %574 = vmatpush1.bf16.msra.mxu0 %v530
        %575 = vmatprep.subr.bf16.mxu0 0
        %576 = vmatpush1.bf16.msra.mxu0 %v531
        %577 = vmatprep.subr.bf16.mxu0 0
        %578 = vmatpush1.bf16.msra.mxu0 %v532
        %579 = vmatprep.subr.bf16.mxu0 0
        %580 = vmatpush1.bf16.msra.mxu0 %v533
        %581 = vmatprep.subr.bf16.mxu0 0
        %582 = vmatpush1.bf16.msra.mxu0 %v534
        %583 = vmatprep.mubr.bf16.mxu0 %v424
        %584 = vmatmul.mubr.bf16.gmra.mrb[0].mxu0 %v423
        %v585 = vpop.f32.mrb[0].mxu0
        %v586 = vadd.f32 0.0, %v585
        %v587 = vpop.f32.mrb[0].mxu0
        %v588 = vpop.f32.mrb[0].mxu0
        %v589 = vadd.f32 0.0, %v588
        %v590 = vpop.f32.mrb[0].mxu0
        %591 = vmatprep.mubr.bf16.mxu0 %v426
        %592 = vmatmul.mubr.bf16.gmra.mrb[0].mxu0 %v425
        %v593 = vpop.f32.mrb[0].mxu0
        %v594 = vadd.f32 0.0, %v593
        %v595 = vpop.f32.mrb[0].mxu0
        %v596 = vpop.f32.mrb[0].mxu0
        %v597 = vadd.f32 0.0, %v596
        %v598 = vpop.f32.mrb[0].mxu0
        %599 = vmatprep.mubr.bf16.mxu0 %v428
        %600 = vmatmul.mubr.bf16.gmra.mrb[0].mxu0 %v427
        %v601 = vpop.f32.mrb[0].mxu0
        %v602 = vadd.f32 0.0, %v601
        %v603 = vpop.f32.mrb[0].mxu0
        %v604 = vpop.f32.mrb[0].mxu0
        %v605 = vadd.f32 0.0, %v604
        %v606 = vpop.f32.mrb[0].mxu0
        %607 = vmatprep.mubr.bf16.mxu0 %v430
        %608 = vmatmul.mubr.bf16.gmra.mrb[0].mxu0 %v429
        %v609 = vpop.f32.mrb[0].mxu0
        %v610 = vadd.f32 0.0, %v609
        %v611 = vpop.f32.mrb[0].mxu0
        %v612 = vpop.f32.mrb[0].mxu0
        %v613 = vadd.f32 0.0, %v612
        %v614 = vpop.f32.mrb[0].mxu0
        %615 = vmatprep.mubr.bf16.mxu0 %v432
        %616 = vmatmul.mubr.bf16.gmra.mrb[0].mxu0 %v431
        %v617 = vpop.f32.mrb[0].mxu0
        %v618 = vadd.f32 0.0, %v617
        %v619 = vpop.f32.mrb[0].mxu0
        %v620 = vpop.f32.mrb[0].mxu0
        %v621 = vadd.f32 0.0, %v620
        %v622 = vpop.f32.mrb[0].mxu0
        %623 = vmatprep.mubr.bf16.mxu0 %v434
        %624 = vmatmul.mubr.bf16.gmra.mrb[0].mxu0 %v433
        %v625 = vpop.f32.mrb[0].mxu0
        %v626 = vadd.f32 0.0, %v625
        %v627 = vpop.f32.mrb[0].mxu0
        %v628 = vpop.f32.mrb[0].mxu0
        %v629 = vadd.f32 0.0, %v628
        %v630 = vpop.f32.mrb[0].mxu0
        %631 = vmatprep.mubr.bf16.mxu0 %v436
        %632 = vmatmul.mubr.bf16.gmra.mrb[0].mxu0 %v435
        %v633 = vpop.f32.mrb[0].mxu0
        %v634 = vadd.f32 0.0, %v633
        %v635 = vpop.f32.mrb[0].mxu0
        %v636 = vpop.f32.mrb[0].mxu0
        %v637 = vadd.f32 0.0, %v636
        %v638 = vpop.f32.mrb[0].mxu0
        %639 = vmatprep.mubr.bf16.mxu0 %v438
        %640 = vmatmul.mubr.bf16.gmra.mrb[0].mxu0 %v437
        %v641 = vpop.f32.mrb[0].mxu0
        %v642 = vadd.f32 0.0, %v641
        %v643 = vpop.f32.mrb[0].mxu0
        %v644 = vpop.f32.mrb[0].mxu0
        %v645 = vadd.f32 0.0, %v644
        %v646 = vpop.f32.mrb[0].mxu0
        %647 = vdwg.mxu0
        %v648 = vld [vmem:[#allocation2] sm:$0xff]
        %v649 = vld [vmem:[#allocation2 + $0x8] sm:$0xff]
        %v650 = vld [vmem:[#allocation2 + $0x10] sm:$0xff]
        %v651 = vld [vmem:[#allocation2 + $0x18] sm:$0xff]
        %v652 = vld [vmem:[#allocation2 + $0x20] sm:$0xff]
        %v653 = vld [vmem:[#allocation2 + $0x28] sm:$0xff]
        %v654 = vld [vmem:[#allocation2 + $0x30] sm:$0xff]
        %v655 = vld [vmem:[#allocation2 + $0x38] sm:$0xff]
        %v656 = vld [vmem:[#allocation2 + $0x40] sm:$0xff]
        %v657 = vld [vmem:[#allocation2 + $0x48] sm:$0xff]
        %v658 = vld [vmem:[#allocation2 + $0x50] sm:$0xff]
        %v659 = vld [vmem:[#allocation2 + $0x58] sm:$0xff]
        %v660 = vld [vmem:[#allocation2 + $0x60] sm:$0xff]
        %v661 = vld [vmem:[#allocation2 + $0x68] sm:$0xff]
        %v662 = vld [vmem:[#allocation2 + $0x70] sm:$0xff]
        %v663 = vld [vmem:[#allocation2 + $0x78] sm:$0xff]
        %v664 = vld [vmem:[%s260] sm:$0xf]
        %v665 = vld [vmem:[%s260 + $0x4] sm:$0xf]
        %v666 = vld [vmem:[%s260 + $0x8] sm:$0xf]
        %v667 = vld [vmem:[%s260 + $0xc] sm:$0xf]
        %v668 = vld [vmem:[%s260 + $0x10] sm:$0xf]
        %v669 = vld [vmem:[%s260 + $0x14] sm:$0xf]
        %v670 = vld [vmem:[%s260 + $0x18] sm:$0xf]
        %v671 = vld [vmem:[%s260 + $0x1c] sm:$0xf]
        %v672 = vld [vmem:[%s260 + $0x20] sm:$0xf]
        %v673 = vld [vmem:[%s260 + $0x24] sm:$0xf]
        %v674 = vld [vmem:[%s260 + $0x28] sm:$0xf]
        %v675 = vld [vmem:[%s260 + $0x2c] sm:$0xf]
        %v676 = vld [vmem:[%s260 + $0x30] sm:$0xf]
        %v677 = vld [vmem:[%s260 + $0x34] sm:$0xf]
        %v678 = vld [vmem:[%s260 + $0x38] sm:$0xf]
        %v679 = vld [vmem:[%s260 + $0x3c] sm:$0xf]
        %v680 = vpack.c.bf16 %v589, %v586
        %v681 = vpack.c.bf16 %v597, %v594
        %v682 = vpack.c.bf16 %v605, %v602
        %v683 = vpack.c.bf16 %v613, %v610
        %v684 = vpack.c.bf16 %v621, %v618
        %v685 = vpack.c.bf16 %v629, %v626
        %v686 = vpack.c.bf16 %v637, %v634
        %v687 = vpack.c.bf16 %v645, %v642
        %v704 = vunpack.c.l.b16 %v664
        %v705 = vunpack.c.l.b16 %v665
        %v706 = vunpack.c.l.b16 %v666
        %v707 = vunpack.c.l.b16 %v667
        %v708 = vunpack.c.l.b16 %v668
        %v709 = vunpack.c.l.b16 %v669
        %v710 = vunpack.c.l.b16 %v670
        %v711 = vunpack.c.l.b16 %v671
        %v712 = vunpack.c.l.b16 %v672
        %v713 = vunpack.c.l.b16 %v673
        %v714 = vunpack.c.l.b16 %v674
        %v715 = vunpack.c.l.b16 %v675
        %v716 = vunpack.c.l.b16 %v676
        %v717 = vunpack.c.l.b16 %v677
        %v718 = vunpack.c.l.b16 %v678
        %v719 = vunpack.c.l.b16 %v679
        %v720 = vpack.c.b16 %v705, %v704
        %v721 = vpack.c.b16 %v707, %v706
        %v722 = vpack.c.b16 %v709, %v708
        %v723 = vpack.c.b16 %v711, %v710
        %v724 = vpack.c.b16 %v713, %v712
        %v725 = vpack.c.b16 %v715, %v714
        %v726 = vpack.c.b16 %v717, %v716
        %v727 = vpack.c.b16 %v719, %v718
        %736 = vmatprep.subr.bf16.mxu0 0
        %737 = vmatpush1.bf16.msra.mxu0 %v680
        %738 = vmatprep.subr.bf16.mxu0 0
        %739 = vmatpush1.bf16.msra.mxu0 %v681
        %740 = vmatprep.subr.bf16.mxu0 0
        %741 = vmatpush1.bf16.msra.mxu0 %v682
        %742 = vmatprep.subr.bf16.mxu0 0
        %743 = vmatpush1.bf16.msra.mxu0 %v683
        %744 = vmatprep.subr.bf16.mxu0 0
        %745 = vmatpush1.bf16.msra.mxu0 %v684
        %746 = vmatprep.subr.bf16.mxu0 0
        %747 = vmatpush1.bf16.msra.mxu0 %v685
        %748 = vmatprep.subr.bf16.mxu0 0
        %749 = vmatpush1.bf16.msra.mxu0 %v686
        %750 = vmatprep.subr.bf16.mxu0 0
        %751 = vmatpush1.bf16.msra.mxu0 %v687
        %752 = vmatprep.subr.bf16.mxu0 0
        %753 = vmatpush1.bf16.msra.mxu0 0
        %754 = vmatprep.subr.bf16.mxu0 0
        %755 = vmatpush1.bf16.msra.mxu0 0
        %756 = vmatprep.subr.bf16.mxu0 0
        %757 = vmatpush1.bf16.msra.mxu0 0
        %758 = vmatprep.subr.bf16.mxu0 0
        %759 = vmatpush1.bf16.msra.mxu0 0
        %760 = vmatprep.subr.bf16.mxu0 0
        %761 = vmatpush1.bf16.msra.mxu0 0
        %762 = vmatprep.subr.bf16.mxu0 0
        %763 = vmatpush1.bf16.msra.mxu0 0
        %764 = vmatprep.subr.bf16.mxu0 0
        %765 = vmatpush1.bf16.msra.mxu0 0
        %766 = vmatprep.subr.bf16.mxu0 0
        %767 = vmatpush1.bf16.msra.mxu0 0
        %768 = vmatprep.mubr.bf16.mxu0 0
        %769 = vmatmul.mubr.bf16.gmra.mrb[0].mxu0 %v720
        %v770 = vpop.f32.mrb[0].mxu0
        %v771 = vadd.f32 0.0, %v770
        %v772 = vpop.f32.mrb[0].mxu0
        %v773 = vpop.f32.mrb[0].mxu0
        %v774 = vadd.f32 0.0, %v773
        %v775 = vpop.f32.mrb[0].mxu0
        %776 = vmatprep.mubr.bf16.mxu0 0
        %777 = vmatmul.mubr.bf16.gmra.mrb[0].mxu0 %v721
        %v778 = vpop.f32.mrb[0].mxu0
        %v779 = vadd.f32 0.0, %v778
        %v780 = vpop.f32.mrb[0].mxu0
        %v781 = vpop.f32.mrb[0].mxu0
        %v782 = vadd.f32 0.0, %v781
        %v783 = vpop.f32.mrb[0].mxu0
        %784 = vmatprep.mubr.bf16.mxu0 0
        %785 = vmatmul.mubr.bf16.gmra.mrb[0].mxu0 %v722
        %v786 = vpop.f32.mrb[0].mxu0
        %v787 = vadd.f32 0.0, %v786
        %v788 = vpop.f32.mrb[0].mxu0
        %v789 = vpop.f32.mrb[0].mxu0
        %v790 = vadd.f32 0.0, %v789
        %v791 = vpop.f32.mrb[0].mxu0
        %792 = vmatprep.mubr.bf16.mxu0 0
        %793 = vmatmul.mubr.bf16.gmra.mrb[0].mxu0 %v723
        %v794 = vpop.f32.mrb[0].mxu0
        %v795 = vadd.f32 0.0, %v794
        %v796 = vpop.f32.mrb[0].mxu0
        %v797 = vpop.f32.mrb[0].mxu0
        %v798 = vadd.f32 0.0, %v797
        %v799 = vpop.f32.mrb[0].mxu0
        %800 = vmatprep.mubr.bf16.mxu0 0
        %801 = vmatmul.mubr.bf16.gmra.mrb[0].mxu0 %v724
        %v802 = vpop.f32.mrb[0].mxu0
        %v803 = vadd.f32 0.0, %v802
        %v804 = vpop.f32.mrb[0].mxu0
        %v805 = vpop.f32.mrb[0].mxu0
        %v806 = vadd.f32 0.0, %v805
        %v807 = vpop.f32.mrb[0].mxu0
        %808 = vmatprep.mubr.bf16.mxu0 0
        %809 = vmatmul.mubr.bf16.gmra.mrb[0].mxu0 %v725
        %v810 = vpop.f32.mrb[0].mxu0
        %v811 = vadd.f32 0.0, %v810
        %v812 = vpop.f32.mrb[0].mxu0
        %v813 = vpop.f32.mrb[0].mxu0
        %v814 = vadd.f32 0.0, %v813
        %v815 = vpop.f32.mrb[0].mxu0
        %816 = vmatprep.mubr.bf16.mxu0 0
        %817 = vmatmul.mubr.bf16.gmra.mrb[0].mxu0 %v726
        %v818 = vpop.f32.mrb[0].mxu0
        %v819 = vadd.f32 0.0, %v818
        %v820 = vpop.f32.mrb[0].mxu0
        %v821 = vpop.f32.mrb[0].mxu0
        %v822 = vadd.f32 0.0, %v821
        %v823 = vpop.f32.mrb[0].mxu0
        %824 = vmatprep.mubr.bf16.mxu0 0
        %825 = vmatmul.mubr.bf16.gmra.mrb[0].mxu0 %v727
        %v826 = vpop.f32.mrb[0].mxu0
        %v827 = vadd.f32 0.0, %v826
        %v828 = vpop.f32.mrb[0].mxu0
        %v829 = vpop.f32.mrb[0].mxu0
        %v830 = vadd.f32 0.0, %v829
        %v831 = vpop.f32.mrb[0].mxu0
        %832 = vdwg.mxu0
        %v833 = vadd.f32 %v648, %v771
        %v834 = vadd.f32 %v649, %v774
        %v835 = vadd.f32 %v650, %v779
        %v836 = vadd.f32 %v651, %v782
        %v837 = vadd.f32 %v652, %v787
        %v838 = vadd.f32 %v653, %v790
        %v839 = vadd.f32 %v654, %v795
        %v840 = vadd.f32 %v655, %v798
        %v841 = vadd.f32 %v656, %v803
        %v842 = vadd.f32 %v657, %v806
        %v843 = vadd.f32 %v658, %v811
        %v844 = vadd.f32 %v659, %v814
        %v845 = vadd.f32 %v660, %v819
        %v846 = vadd.f32 %v661, %v822
        %v847 = vadd.f32 %v662, %v827
        %v848 = vadd.f32 %v663, %v830
        %849 = vst [vmem:[#allocation2] sm:$0xff] %v833
        %850 = vst [vmem:[#allocation2 + $0x8] sm:$0xff] %v834
        %851 = vst [vmem:[#allocation2 + $0x10] sm:$0xff] %v835
        %852 = vst [vmem:[#allocation2 + $0x18] sm:$0xff] %v836
        %853 = vst [vmem:[#allocation2 + $0x20] sm:$0xff] %v837
        %854 = vst [vmem:[#allocation2 + $0x28] sm:$0xff] %v838
        %855 = vst [vmem:[#allocation2 + $0x30] sm:$0xff] %v839
        %856 = vst [vmem:[#allocation2 + $0x38] sm:$0xff] %v840
        %857 = vst [vmem:[#allocation2 + $0x40] sm:$0xff] %v841
        %858 = vst [vmem:[#allocation2 + $0x48] sm:$0xff] %v842
        %859 = vst [vmem:[#allocation2 + $0x50] sm:$0xff] %v843
        %860 = vst [vmem:[#allocation2 + $0x58] sm:$0xff] %v844
        %861 = vst [vmem:[#allocation2 + $0x60] sm:$0xff] %v845
        %862 = vst [vmem:[#allocation2 + $0x68] sm:$0xff] %v846
        %863 = vst [vmem:[#allocation2 + $0x70] sm:$0xff] %v847
        %864 = vst [vmem:[#allocation2 + $0x78] sm:$0xff] %v848
        // Predicated region
        $region53: #{tpu_custom_call.1} parent=35 // pred_check
          %p865 = pneg %p307
        $region54: #{tpu_custom_call.1} parent=35 // pred_check_branch
          %867 = sbr.rel (%p865) target = $region56
        $region55: #{tpu_custom_call.1} parent=35 // pred_region
          %v868 = vld [vmem:[#allocation2] sm:$0xff]
          %v869 = vld [vmem:[#allocation2 + $0x8] sm:$0xff]
          %v870 = vld [vmem:[#allocation2 + $0x10] sm:$0xff]
          %v871 = vld [vmem:[#allocation2 + $0x18] sm:$0xff]
          %v872 = vld [vmem:[#allocation2 + $0x20] sm:$0xff]
          %v873 = vld [vmem:[#allocation2 + $0x28] sm:$0xff]
          %v874 = vld [vmem:[#allocation2 + $0x30] sm:$0xff]
          %v875 = vld [vmem:[#allocation2 + $0x38] sm:$0xff]
          %v876 = vld [vmem:[#allocation2 + $0x40] sm:$0xff]
          %v877 = vld [vmem:[#allocation2 + $0x48] sm:$0xff]
          %v878 = vld [vmem:[#allocation2 + $0x50] sm:$0xff]
          %v879 = vld [vmem:[#allocation2 + $0x58] sm:$0xff]
          %v880 = vld [vmem:[#allocation2 + $0x60] sm:$0xff]
          %v881 = vld [vmem:[#allocation2 + $0x68] sm:$0xff]
          %v882 = vld [vmem:[#allocation2 + $0x70] sm:$0xff]
          %v883 = vld [vmem:[#allocation2 + $0x78] sm:$0xff]
          %v884 = vld [vmem:[%s3] sm:$0x1]
          %v886 = vlaneseq
          %v887 = vshrl.u32 %v886, 7
          %v888 = vsub.s32 0, %v887
          %v889 = vrot.slane %v884, %v888
          %v891 = vadd.f32 %v868, %v889
          %v892 = vadd.f32 %v869, %v889
          %v893 = vadd.f32 %v870, %v889
          %v894 = vadd.f32 %v871, %v889
          %v895 = vadd.f32 %v872, %v889
          %v896 = vadd.f32 %v873, %v889
          %v897 = vadd.f32 %v874, %v889
          %v898 = vadd.f32 %v875, %v889
          %v899 = vadd.f32 %v876, %v889
          %v900 = vadd.f32 %v877, %v889
          %v901 = vadd.f32 %v878, %v889
          %v902 = vadd.f32 %v879, %v889
          %v903 = vadd.f32 %v880, %v889
          %v904 = vadd.f32 %v881, %v889
          %v905 = vadd.f32 %v882, %v889
          %v906 = vadd.f32 %v883, %v889
          %v907 = vmax.f32 %v891, 0.0
          %v908 = vmax.f32 %v892, 0.0
          %v909 = vmax.f32 %v893, 0.0
          %v910 = vmax.f32 %v894, 0.0
          %v911 = vmax.f32 %v895, 0.0
          %v912 = vmax.f32 %v896, 0.0
          %v913 = vmax.f32 %v897, 0.0
          %v914 = vmax.f32 %v898, 0.0
          %v915 = vmax.f32 %v899, 0.0
          %v916 = vmax.f32 %v900, 0.0
          %v917 = vmax.f32 %v901, 0.0
          %v918 = vmax.f32 %v902, 0.0
          %v919 = vmax.f32 %v903, 0.0
          %v920 = vmax.f32 %v904, 0.0
          %v921 = vmax.f32 %v905, 0.0
          %v922 = vmax.f32 %v906, 0.0
          %v923 = vpack.c.bf16 %v908, %v907
          %v924 = vpack.c.bf16 %v910, %v909
          %v925 = vpack.c.bf16 %v912, %v911
          %v926 = vpack.c.bf16 %v914, %v913
          %v927 = vpack.c.bf16 %v916, %v915
          %v928 = vpack.c.bf16 %v918, %v917
          %v929 = vpack.c.bf16 %v920, %v919
          %v930 = vpack.c.bf16 %v922, %v921
          %v939 = vunpack.c.l.b16 %v923
          %v940 = vunpack.c.h.b16 %v923
          %v941 = vunpack.c.l.b16 %v924
          %v942 = vunpack.c.h.b16 %v924
          %v943 = vunpack.c.l.b16 %v925
          %v944 = vunpack.c.h.b16 %v925
          %v945 = vunpack.c.l.b16 %v926
          %v946 = vunpack.c.h.b16 %v926
          %v947 = vunpack.c.l.b16 %v927
          %v948 = vunpack.c.h.b16 %v927
          %v949 = vunpack.c.l.b16 %v928
          %v950 = vunpack.c.h.b16 %v928
          %v951 = vunpack.c.l.b16 %v929
          %v952 = vunpack.c.h.b16 %v929
          %v953 = vunpack.c.l.b16 %v930
          %v954 = vunpack.c.h.b16 %v930
          %v955 = vpack.c.b16 %v939, %v939
          %v956 = vpack.c.b16 %v940, %v940
          %v957 = vpack.c.b16 %v941, %v941
          %v958 = vpack.c.b16 %v942, %v942
          %v959 = vpack.c.b16 %v943, %v943
          %v960 = vpack.c.b16 %v944, %v944
          %v961 = vpack.c.b16 %v945, %v945
          %v962 = vpack.c.b16 %v946, %v946
          %v963 = vpack.c.b16 %v947, %v947
          %v964 = vpack.c.b16 %v948, %v948
          %v965 = vpack.c.b16 %v949, %v949
          %v966 = vpack.c.b16 %v950, %v950
          %v967 = vpack.c.b16 %v951, %v951
          %v968 = vpack.c.b16 %v952, %v952
          %v969 = vpack.c.b16 %v953, %v953
          %v970 = vpack.c.b16 %v954, %v954
          %987 = vst [vmem:[%s302] sm:$0xf] %v955
          %988 = vst [vmem:[%s302 + $0x4] sm:$0xf] %v956
          %989 = vst [vmem:[%s302 + $0x8] sm:$0xf] %v957
          %990 = vst [vmem:[%s302 + $0xc] sm:$0xf] %v958
          %991 = vst [vmem:[%s302 + $0x10] sm:$0xf] %v959
          %992 = vst [vmem:[%s302 + $0x14] sm:$0xf] %v960
          %993 = vst [vmem:[%s302 + $0x18] sm:$0xf] %v961
          %994 = vst [vmem:[%s302 + $0x1c] sm:$0xf] %v962
          %995 = vst [vmem:[%s302 + $0x20] sm:$0xf] %v963
          %996 = vst [vmem:[%s302 + $0x24] sm:$0xf] %v964
          %997 = vst [vmem:[%s302 + $0x28] sm:$0xf] %v965
          %998 = vst [vmem:[%s302 + $0x2c] sm:$0xf] %v966
          %999 = vst [vmem:[%s302 + $0x30] sm:$0xf] %v967
          %1000 = vst [vmem:[%s302 + $0x34] sm:$0xf] %v968
          %1001 = vst [vmem:[%s302 + $0x38] sm:$0xf] %v969
          %1002 = vst [vmem:[%s302 + $0x3c] sm:$0xf] %v970
        $region56: #{tpu_custom_call.1} parent=35 // pred_fallthru
          _
        %s1003 = sand.u32 %s153, 1
        %s1004 = scalar_lea.sflag [#allocation5], %s1003
        %s1005 = sand.u32 %s153, 1
        %s1006 = smul.addr %s1005, 64
        %s1007 = scalar_lea.vmem [#allocation9], %s1006
        // Predicated region
        $region57: #{tpu_custom_call.1} parent=35 // pred_check
          %p1008 = pneg %p163
        $region58: #{tpu_custom_call.1} parent=35 // pred_check_branch
          %1010 = sbr.rel (%p1008) target = $region60
        $region59: #{tpu_custom_call.1} parent=35 // pred_region
          %s1011 = smul.u32 16, %s30
          %s1013 = ssub.s32 1024, 1024
          %1014 = vsyncadd %s1004, %s1013
          %s1015 = smul.addr %s29, 16
          %s1016 = sadd.s32 %s1011, %s1015
          %s1017 = smul.addr %s1016, 64
          %s1018 = scalar_lea.hbm %s4, %s1017
          %s1019 = sshll.u32 %s1007, 4
          %s1020 = int_to_ptr.vmem [resolvable:$true] %s1019
          %1025 = dma.vmem_to_hbm [thread:$0]  %s1020, 1024, %s1018, %s1004, 64, 64, 4
        $region60: #{tpu_custom_call.1} parent=35 // pred_fallthru
          _
      $region36: #{tpu_custom_call.1} parent=5 // pred_fallthru
        _
      %p1026 = scmp.le.s32.totalorder 2, %s19
      // Predicated region
      $region61: #{tpu_custom_call.1} parent=5 // pred_check
        %p1027 = pneg %p1026
      $region62: #{tpu_custom_call.1} parent=5 // pred_check_branch
        %1029 = sbr.rel (%p1027) target = $region64
      $region63: #{tpu_custom_call.1} parent=5 // pred_region
        %s1030 = ssub.s32 %s19, 2
        // Predicated region
        $region65: #{tpu_custom_call.1} parent=63 // pred_check
          %p1031 = pneg %p169
        $region66: #{tpu_custom_call.1} parent=63 // pred_check_branch
          %1033 = sbr.rel (%p1031) target = $region68
        $region67: #{tpu_custom_call.1} parent=63 // pred_region
          %s1034 = sand.u32 %s154, 1
          %s1035 = scalar_lea.sflag [#allocation5], %s1034
          %s1036 = sand.u32 %s154, 1
          %s1037 = smul.addr %s1036, 64
          %s1038 = scalar_lea.vmem [#allocation9], %s1037
          %1039 = dma.done %s1035, 1024
        $region68: #{tpu_custom_call.1} parent=63 // pred_fallthru
          _
      $region64: #{tpu_custom_call.1} parent=5 // pred_fallthru
        _
    $region6: #{tpu_custom_call.1} parent=1 // loop_footer
      %s23 = sadd.s32 1, %s19
    $region7: #{tpu_custom_call.1} parent=1 // loop_footer_branch
      %18 = sbr.rel target = $region3
    $region8: #{tpu_custom_call.1} parent=1 // loop_exit
      _
    %1040 = vsyncpa [#allocation4], 1
    %s1041 = scalar_lea.sflag [#allocation4], 1
    %1042 = vsyncpa %s1041, 1
    %1043 = vsyncpa [#allocation7], 1
    %s1044 = scalar_lea.sflag [#allocation7], 1
    %1045 = vsyncpa %s1044, 1
    %1046 = vsyncpa [#allocation5], 1
    %s1047 = scalar_lea.sflag [#allocation5], 1
    %1048 = vsyncpa %s1047, 1

</llo_original>
